<compile_context>
chip_gen: v6e
topology: v6e:2x2x1
jax: 0.10.0
libtpu: 0.0.40
codegen_flags: <defaults>
</compile_context>

<pallas_src>
import functools

import numpy as np
import jax
import jax.numpy as jnp
from jax.experimental import pallas as pl
from jax.experimental.pallas import tpu as pltpu

LOG_STD_MAX = 2.0
LOG_STD_MIN = -5.0


def _actor_kernel(HP, use_bf16, x_ref, w1_ref, b1_ref, w2_ref, b2_ref, wh_ref, bh_ref,
                  out_ref):
    """One batch tile: (tb, S) -> lane-dense (tb, 2*HP) = [mean pad | rescaled log_std pad]."""

    def dot(a, b):
        # Weights are already pre-cast in the wrapper; only the activation needs a cast.
        if use_bf16:
            a = a.astype(jnp.bfloat16)
        return jnp.dot(a, b, preferred_element_type=jnp.float32)

    x = x_ref[...]                                                   # (tb, S)  f32
    h = jnp.maximum(dot(x, w1_ref[...]) + b1_ref[...], 0.0)          # (tb, 256)
    h = jnp.maximum(dot(h, w2_ref[...]) + b2_ref[...], 0.0)          # (tb, 256)
    o = dot(h, wh_ref[...]) + bh_ref[...]                            # (tb, 2*HP)

    # Mean head: raw.  Logstd head (upper, vreg-aligned 128-lane half): tanh + affine.
    ls = jnp.tanh(o[:, HP:])
    ls = LOG_STD_MIN + 0.5 * (LOG_STD_MAX - LOG_STD_MIN) * (ls + 1.0)
    out_ref[:, :HP] = o[:, :HP]                                      # aligned full-lane store
    out_ref[:, HP:] = ls                                             # aligned full-lane store


def pack_actor_params(params, *, use_bf16=False):
    """One-time packing of the raw (in, out)-layout params for the kernel.

    - Pads each head to HP (>=128, multiple of 128) lanes and concatenates lane-wise.
    - Optionally pre-casts the matmul weights to bf16 (biases stay f32).
    Call this once and reuse the result to keep packing out of the per-call path.
    """
    A = params["b_mean"].shape[-1]
    HP = max(128, ((A + 127) // 128) * 128)
    wdt = jnp.bfloat16 if use_bf16 else jnp.float32

    def pad_lanes(a):
        return jnp.pad(a, ((0, 0), (0, HP - A)))

    wh = jnp.concatenate([pad_lanes(params["w_mean"]), pad_lanes(params["w_logstd"])],
                         axis=-1)
    bh = jnp.concatenate([pad_lanes(params["b_mean"]), pad_lanes(params["b_logstd"])],
                         axis=-1).astype(jnp.float32)
    return {
        "w1": params["w1"].astype(wdt),
        "b1": params["b1"].astype(jnp.float32),
        "w2": params["w2"].astype(wdt),
        "b2": params["b2"].astype(jnp.float32),
        "wh": wh.astype(wdt),
        "bh": bh,
        "A": int(A),
        "HP": int(HP),
        "use_bf16": bool(use_bf16),
    }


def actor_forward(x, params, *, tb=None, use_bf16=False):
    """Pallas wrapper.  Returns (mean, log_std), each (B, action_dim) float32.

    `params` may be the raw dict from init_params (packed lazily) or the result of
    pack_actor_params (preferred for repeated calls).
    """
    packed = params if "wh" in params else pack_actor_params(params, use_bf16=use_bf16)
    B, S = x.shape
    A, HP = packed["A"], packed["HP"]
    use_bf16 = packed["use_bf16"]

    # Tile selection: one tile (no per-step overhead) up to 1024 rows; for larger
    # batches use >= 2 tiles of <= 2048 rows so v7x's two TensorCores both get work
    # while per-step overhead stays amortized.
    if tb is None:
        if B < 1024:
            tb = B
        else:
            n_steps = max(2, pl.cdiv(B, 2048))
            tb = ((pl.cdiv(B, n_steps) + 7) // 8) * 8
    if tb >= B:
        tb = B
        grid = 1
    else:
        tb = max(8, (tb // 8) * 8)
        grid = pl.cdiv(B, tb)  # no jnp.pad: rows are independent, partial last block OK

    weights = [packed["w1"], packed["b1"], packed["w2"], packed["b2"],
               packed["wh"], packed["bh"]]

    def full_spec(arr):
        # Grid-invariant full block: fetched once, stays resident in VMEM.
        return pl.BlockSpec(arr.shape, lambda i: (0, 0))

    out = pl.pallas_call(
        functools.partial(_actor_kernel, HP, use_bf16),
        out_shape=jax.ShapeDtypeStruct((B, 2 * HP), jnp.float32),
        grid=(grid,),
        in_specs=[pl.BlockSpec((tb, S), lambda i: (i, 0))]
                 + [full_spec(w) for w in weights],
        out_specs=pl.BlockSpec((tb, 2 * HP), lambda i: (i, 0)),
        compiler_params=pltpu.CompilerParams(dimension_semantics=("parallel",)),
    )(x, *weights)

    return out[:, :A], out[:, HP:HP + A]


def actor_reference(x, params):
    """Pure-JAX reference matching the PyTorch forward."""
    h = jnp.maximum(x @ params["w1"] + params["b1"], 0.0)
    h = jnp.maximum(h @ params["w2"] + params["b2"], 0.0)
    mean = h @ params["w_mean"] + params["b_mean"]
    log_std = jnp.tanh(h @ params["w_logstd"] + params["b_logstd"])
    log_std = LOG_STD_MIN + 0.5 * (LOG_STD_MAX - LOG_STD_MIN) * (log_std + 1.0)
    return mean, log_std


def init_params(key, obs_dim, action_dim, hidden=256):
    """PyTorch-default-style uniform init, weights stored as (in, out)."""
    ks = jax.random.split(key, 8)

    def lin(kw, kb, fan_in, fan_out):
        bound = 1.0 / np.sqrt(fan_in)
        w = jax.random.uniform(kw, (fan_in, fan_out), jnp.float32, -bound, bound)
        b = jax.random.uniform(kb, (1, fan_out), jnp.float32, -bound, bound)
        return w, b

    p = {}
    p["w1"], p["b1"] = lin(ks[0], ks[1], obs_dim, hidden)
    p["w2"], p["b2"] = lin(ks[2], ks[3], hidden, hidden)
    p["w_mean"], p["b_mean"] = lin(ks[4], ks[5], hidden, action_dim)
    p["w_logstd"], p["b_logstd"] = lin(ks[6], ks[7], hidden, action_dim)
    return p


if __name__ == "__main__":
    # Small, module-consistent shapes: HalfCheetah-like obs_dim=17, action_dim=6.
    B, S, A = 8, 17, 6
    key = jax.random.PRNGKey(0)
    kx, kp = jax.random.split(key)
    x = jax.random.normal(kx, (B, S), jnp.float32)
    params = init_params(kp, S, A)

    # Pack once (pads/concats heads, optional bf16 precast), then run the kernel.
    packed = pack_actor_params(params, use_bf16=False)
    mean, log_std = actor_forward(x, packed)
    jax.block_until_ready((mean, log_std))

    mean_ref, ls_ref = actor_reference(x, params)
    assert mean.shape == (B, A) and log_std.shape == (B, A)
    assert np.all(np.isfinite(np.asarray(mean)))
    assert np.all(np.isfinite(np.asarray(log_std)))
    assert np.allclose(np.asarray(mean), np.asarray(mean_ref), atol=1e-2, rtol=1e-2)
    assert np.allclose(np.asarray(log_std), np.asarray(ls_ref), atol=1e-2, rtol=1e-2)
    # TODO(synk): get_action (Normal rsample + tanh squashing + log_prob) is a sampling
    # routine outside forward(); not implemented here.
    print("KERNEL_OK")
</pallas_src>

<mosaic_0001>
module attributes {stable_mosaic.version = 11 : i64} {
  func.func @_actor_kernel(%arg0: i32, %arg1: memref<8x17xf32, #tpu.memory_space<vmem>>, %arg2: memref<17x256xf32, #tpu.memory_space<vmem>>, %arg3: memref<1x256xf32, #tpu.memory_space<vmem>>, %arg4: memref<256x256xf32, #tpu.memory_space<vmem>>, %arg5: memref<1x256xf32, #tpu.memory_space<vmem>>, %arg6: memref<256x256xf32, #tpu.memory_space<vmem>>, %arg7: memref<1x256xf32, #tpu.memory_space<vmem>>, %arg8: memref<8x256xf32, #tpu.memory_space<vmem>>) attributes {dimension_semantics = [#tpu.dimension_semantics<parallel>], iteration_bounds = array<i64: 1>, scalar_prefetch = 0 : i64, scratch_operands = 0 : i64, tpu.core_type = #tpu.core_type<tc>, window_params = [{transform_indices = @transform_0, window_bounds = array<i64: 8, 17>}, {pipeline_mode = #tpu.pipeline_mode<synchronous>, transform_indices = @transform_1, window_bounds = array<i64: 17, 256>}, {pipeline_mode = #tpu.pipeline_mode<synchronous>, transform_indices = @transform_2, window_bounds = array<i64: 1, 256>}, {pipeline_mode = #tpu.pipeline_mode<synchronous>, transform_indices = @transform_3, window_bounds = array<i64: 256, 256>}, {pipeline_mode = #tpu.pipeline_mode<synchronous>, transform_indices = @transform_4, window_bounds = array<i64: 1, 256>}, {pipeline_mode = #tpu.pipeline_mode<synchronous>, transform_indices = @transform_5, window_bounds = array<i64: 256, 256>}, {pipeline_mode = #tpu.pipeline_mode<synchronous>, transform_indices = @transform_6, window_bounds = array<i64: 1, 256>}, {transform_indices = @transform_7, window_bounds = array<i64: 8, 256>}]} {
    %c0 = arith.constant 0 : index
    %c0_0 = arith.constant 0 : index
    %0 = vector.load %arg1[%c0, %c0_0] : memref<8x17xf32, #tpu.memory_space<vmem>>, vector<8x17xf32>
    %c0_1 = arith.constant 0 : index
    %c0_2 = arith.constant 0 : index
    %1 = vector.load %arg2[%c0_1, %c0_2] : memref<17x256xf32, #tpu.memory_space<vmem>>, vector<17x256xf32>
    %cst = arith.constant dense<0.000000e+00> : vector<8x256xf32>
    %2 = tpu.matmul %0, %1, %cst {dimension_numbers = #tpu.dot_dimension_numbers<[1], [0], [0], [1], [0, 0, 1, 1], [], []>} : vector<8x17xf32>, vector<17x256xf32>, vector<8x256xf32> -> vector<8x256xf32>
    %c0_3 = arith.constant 0 : index
    %c0_4 = arith.constant 0 : index
    %3 = vector.load %arg3[%c0_3, %c0_4] : memref<1x256xf32, #tpu.memory_space<vmem>>, vector<1x256xf32>
    %4 = vector.broadcast %3 : vector<1x256xf32> to vector<8x256xf32>
    %5 = arith.addf %2, %4 : vector<8x256xf32>
    %cst_5 = arith.constant 0.000000e+00 : f32
    %6 = vector.broadcast %cst_5 : f32 to vector<8x256xf32>
    %7 = arith.maximumf %5, %6 : vector<8x256xf32>
    %c0_6 = arith.constant 0 : index
    %c0_7 = arith.constant 0 : index
    %8 = vector.load %arg4[%c0_6, %c0_7] : memref<256x256xf32, #tpu.memory_space<vmem>>, vector<256x256xf32>
    %cst_8 = arith.constant dense<0.000000e+00> : vector<8x256xf32>
    %9 = tpu.matmul %7, %8, %cst_8 {dimension_numbers = #tpu.dot_dimension_numbers<[1], [0], [0], [1], [0, 0, 1, 1], [], []>} : vector<8x256xf32>, vector<256x256xf32>, vector<8x256xf32> -> vector<8x256xf32>
    %c0_9 = arith.constant 0 : index
    %c0_10 = arith.constant 0 : index
    %10 = vector.load %arg5[%c0_9, %c0_10] : memref<1x256xf32, #tpu.memory_space<vmem>>, vector<1x256xf32>
    %11 = vector.broadcast %10 : vector<1x256xf32> to vector<8x256xf32>
    %12 = arith.addf %9, %11 : vector<8x256xf32>
    %cst_11 = arith.constant 0.000000e+00 : f32
    %13 = vector.broadcast %cst_11 : f32 to vector<8x256xf32>
    %14 = arith.maximumf %12, %13 : vector<8x256xf32>
    %c0_12 = arith.constant 0 : index
    %c0_13 = arith.constant 0 : index
    %15 = vector.load %arg6[%c0_12, %c0_13] : memref<256x256xf32, #tpu.memory_space<vmem>>, vector<256x256xf32>
    %cst_14 = arith.constant dense<0.000000e+00> : vector<8x256xf32>
    %16 = tpu.matmul %14, %15, %cst_14 {dimension_numbers = #tpu.dot_dimension_numbers<[1], [0], [0], [1], [0, 0, 1, 1], [], []>} : vector<8x256xf32>, vector<256x256xf32>, vector<8x256xf32> -> vector<8x256xf32>
    %c0_15 = arith.constant 0 : index
    %c0_16 = arith.constant 0 : index
    %17 = vector.load %arg7[%c0_15, %c0_16] : memref<1x256xf32, #tpu.memory_space<vmem>>, vector<1x256xf32>
    %18 = vector.broadcast %17 : vector<1x256xf32> to vector<8x256xf32>
    %19 = arith.addf %16, %18 : vector<8x256xf32>
    %20 = vector.extract_strided_slice %19 {offsets = [0, 128], sizes = [8, 128], strides = [1, 1]} : vector<8x256xf32> to vector<8x128xf32>
    %21 = math.tanh %20 : vector<8x128xf32>
    %cst_17 = arith.constant 1.000000e+00 : f32
    %22 = vector.broadcast %cst_17 : f32 to vector<8x128xf32>
    %23 = arith.addf %21, %22 : vector<8x128xf32>
    %cst_18 = arith.constant 3.500000e+00 : f32
    %24 = vector.broadcast %cst_18 : f32 to vector<8x128xf32>
    %25 = arith.mulf %24, %23 : vector<8x128xf32>
    %cst_19 = arith.constant -5.000000e+00 : f32
    %26 = vector.broadcast %cst_19 : f32 to vector<8x128xf32>
    %27 = arith.addf %26, %25 : vector<8x128xf32>
    %28 = vector.extract_strided_slice %19 {offsets = [0, 0], sizes = [8, 128], strides = [1, 1]} : vector<8x256xf32> to vector<8x128xf32>
    %c0_20 = arith.constant 0 : index
    %c0_21 = arith.constant 0 : index
    %29 = vector.load %arg8[%c0_20, %c0_21] : memref<8x256xf32, #tpu.memory_space<vmem>>, vector<8x128xf32>
    tpu.vector_store %arg8[%c0_20, %c0_21], %28 {strides = array<i32>} : memref<8x256xf32, #tpu.memory_space<vmem>>, vector<8x128xf32>,
    %c0_22 = arith.constant 0 : index
    %c128 = arith.constant 128 : index
    %30 = vector.load %arg8[%c0_22, %c128] : memref<8x256xf32, #tpu.memory_space<vmem>>, vector<8x128xf32>
    tpu.vector_store %arg8[%c0_22, %c128], %27 {strides = array<i32>} : memref<8x256xf32, #tpu.memory_space<vmem>>, vector<8x128xf32>,
    return
  }
  func.func @transform_0(%arg0: i32) -> (i32, i32) {
    %c0_i32 = arith.constant 0 : i32
    %c0_i32_0 = arith.constant 0 : i32
    return %arg0, %c0_i32 : i32, i32
  }
  func.func @transform_1(%arg0: i32) -> (i32, i32) {
    %c0_i32 = arith.constant 0 : i32
    %c0_i32_0 = arith.constant 0 : i32
    %c0_i32_1 = arith.constant 0 : i32
    return %c0_i32, %c0_i32_0 : i32, i32
  }
  func.func @transform_2(%arg0: i32) -> (i32, i32) {
    %c0_i32 = arith.constant 0 : i32
    %c0_i32_0 = arith.constant 0 : i32
    %c0_i32_1 = arith.constant 0 : i32
    return %c0_i32, %c0_i32_0 : i32, i32
  }
  func.func @transform_3(%arg0: i32) -> (i32, i32) {
    %c0_i32 = arith.constant 0 : i32
    %c0_i32_0 = arith.constant 0 : i32
    %c0_i32_1 = arith.constant 0 : i32
    return %c0_i32, %c0_i32_0 : i32, i32
  }
  func.func @transform_4(%arg0: i32) -> (i32, i32) {
    %c0_i32 = arith.constant 0 : i32
    %c0_i32_0 = arith.constant 0 : i32
    %c0_i32_1 = arith.constant 0 : i32
    return %c0_i32, %c0_i32_0 : i32, i32
  }
  func.func @transform_5(%arg0: i32) -> (i32, i32) {
    %c0_i32 = arith.constant 0 : i32
    %c0_i32_0 = arith.constant 0 : i32
    %c0_i32_1 = arith.constant 0 : i32
    return %c0_i32, %c0_i32_0 : i32, i32
  }
  func.func @transform_6(%arg0: i32) -> (i32, i32) {
    %c0_i32 = arith.constant 0 : i32
    %c0_i32_0 = arith.constant 0 : i32
    %c0_i32_1 = arith.constant 0 : i32
    return %c0_i32, %c0_i32_0 : i32, i32
  }
  func.func @transform_7(%arg0: i32) -> (i32, i32) {
    %c0_i32 = arith.constant 0 : i32
    %c0_i32_0 = arith.constant 0 : i32
    return %arg0, %c0_i32 : i32, i32
  }
}

</mosaic_0001>

<llo_original>
// kernel: tpu_custom_call.1
$region0: #{tpu_custom_call.1}
  #allocation0 [shape = 'u32[]', space=smem, size = 0x4, offset = 0x4, fixed_abs, tag = 'smem constant byte address 0x4 - core index']
  #allocation1 [shape = 'u32[144,128]{1,0:T(1,128)}', space=vmem, size = 0x12000, scoped, tag = 'internal scratch']
  %s0 = inlined_call_operand.hbm [shape: f32[8,17], index: 0, kind: input, shape index: {}]
  %s1 = inlined_call_operand.hbm [shape: f32[17,256], index: 1, kind: input, shape index: {}]
  %s2 = inlined_call_operand.vmem [shape: f32[1,256], index: 2, kind: input, shape index: {}]
  %s3 = inlined_call_operand.hbm [shape: f32[256,256], index: 3, kind: input, shape index: {}]
  %s4 = inlined_call_operand.vmem [shape: f32[1,256], index: 4, kind: input, shape index: {}]
  %s5 = inlined_call_operand.hbm [shape: f32[256,256], index: 5, kind: input, shape index: {}]
  %s6 = inlined_call_operand.vmem [shape: f32[1,256], index: 6, kind: input, shape index: {}]
  %s7 = inlined_call_operand.hbm [shape: f32[8,256], index: 7, kind: output, shape index: {}]
  %s8 = sld [smem:[#allocation0]]
  $region54: #{tpu_custom_call.1} parent=0
    _
  %s10 = ssub.s32 1, %s8
  %s11 = scalar_select 0, %s10, %s8
  $region1: #{tpu_custom_call.1} parent=0
    #allocation2 [shape = 'u8[4096]{0}', space=vmem, size = 0x1000, scoped, tag = 'input window, operand 0, single buffered']
    #allocation3 [shape = 's32[1]{0}', space=sflag, size = 0x4, scoped, tag = 'scoped memory for tpu_custom_call.1']
    #allocation4 [shape = 's32[1]{0}', space=sflag, size = 0x4, scoped, tag = 'scoped memory for tpu_custom_call.1']
    #allocation5 [shape = 'u8[24576]{0}', space=vmem, size = 0x6000, scoped, tag = 'input window, operand 1, single buffered']
    #allocation6 [shape = 's32[1]{0}', space=sflag, size = 0x4, scoped, tag = 'scoped memory for tpu_custom_call.1']
    #allocation7 [shape = 'u8[262144]{0}', space=vmem, size = 0x40000, scoped, tag = 'input window, operand 3, single buffered']
    #allocation8 [shape = 'u8[262144]{0}', space=vmem, size = 0x40000, scoped, tag = 'input window, operand 5, single buffered']
    #allocation9 [shape = 's32[1]{0}', space=sflag, size = 0x4, scoped, tag = 'scoped memory for tpu_custom_call.1']
    #allocation10 [shape = 'u8[8192]{0}', space=vmem, size = 0x2000, scoped, tag = 'output window, operand 0, single buffered']
    %12 = vsyncpa [#allocation3], 0
    %13 = vsyncpa [#allocation6], 0
    %14 = vsyncpa [#allocation9], 0
    %15 = vsyncpa [#allocation4], 0
    // Predicated region
    $region2: #{tpu_custom_call.1} parent=1 // pred_check
      _
    $region3: #{tpu_custom_call.1} parent=1 // pred_check_branch
      %17 = sbr.rel (0) target = $region5
    $region4: #{tpu_custom_call.1} parent=1 // pred_region
      %s19 = ssub.s32 128, 128
      %20 = vsyncadd [#allocation3], %s19
      %s22 = sshll.u32 [#allocation2], 4
      %s23 = int_to_ptr.vmem [resolvable:$true] %s22
      %25 = dma.hbm_to_vmem [thread:$0]  %s0, 128, %s23, [#allocation3]
    $region5: #{tpu_custom_call.1} parent=1 // pred_fallthru
      _
    // Predicated region
    $region6: #{tpu_custom_call.1} parent=1 // pred_check
      _
    $region7: #{tpu_custom_call.1} parent=1 // pred_check_branch
      %27 = sbr.rel (0) target = $region9
    $region8: #{tpu_custom_call.1} parent=1 // pred_region
      %s29 = ssub.s32 768, 768
      %30 = vsyncadd [#allocation6], %s29
      %s31 = sshll.u32 [#allocation5], 4
      %s32 = int_to_ptr.vmem [resolvable:$true] %s31
      %37 = dma.hbm_to_vmem [thread:$0]  %s1, 768, %s32, [#allocation6], 256, 256, 16
    $region9: #{tpu_custom_call.1} parent=1 // pred_fallthru
      _
    // Predicated region
    $region10: #{tpu_custom_call.1} parent=1 // pred_check
      _
    $region11: #{tpu_custom_call.1} parent=1 // pred_check_branch
      %39 = sbr.rel (0) target = $region13
    $region12: #{tpu_custom_call.1} parent=1 // pred_region
      _
    $region13: #{tpu_custom_call.1} parent=1 // pred_fallthru
      _
    // Predicated region
    $region14: #{tpu_custom_call.1} parent=1 // pred_check
      _
    $region15: #{tpu_custom_call.1} parent=1 // pred_check_branch
      %41 = sbr.rel (0) target = $region17
    $region16: #{tpu_custom_call.1} parent=1 // pred_region
      %s43 = ssub.s32 8192, 8192
      %44 = vsyncadd [#allocation6], %s43
      %s45 = sshll.u32 [#allocation7], 4
      %s46 = int_to_ptr.vmem [resolvable:$true] %s45
      %51 = dma.hbm_to_vmem [thread:$0]  %s3, 8192, %s46, [#allocation6], 256, 256, 16
    $region17: #{tpu_custom_call.1} parent=1 // pred_fallthru
      _
    // Predicated region
    $region18: #{tpu_custom_call.1} parent=1 // pred_check
      _
    $region19: #{tpu_custom_call.1} parent=1 // pred_check_branch
      %53 = sbr.rel (0) target = $region21
    $region20: #{tpu_custom_call.1} parent=1 // pred_region
      _
    $region21: #{tpu_custom_call.1} parent=1 // pred_fallthru
      _
    // Predicated region
    $region22: #{tpu_custom_call.1} parent=1 // pred_check
      _
    $region23: #{tpu_custom_call.1} parent=1 // pred_check_branch
      %55 = sbr.rel (0) target = $region25
    $region24: #{tpu_custom_call.1} parent=1 // pred_region
      %s57 = ssub.s32 8192, 8192
      %58 = vsyncadd [#allocation9], %s57
      %s59 = sshll.u32 [#allocation8], 4
      %s60 = int_to_ptr.vmem [resolvable:$true] %s59
      %65 = dma.hbm_to_vmem [thread:$0]  %s5, 8192, %s60, [#allocation9], 256, 256, 16
    $region25: #{tpu_custom_call.1} parent=1 // pred_fallthru
      _
    // Predicated region
    $region26: #{tpu_custom_call.1} parent=1 // pred_check
      _
    $region27: #{tpu_custom_call.1} parent=1 // pred_check_branch
      %67 = sbr.rel (0) target = $region29
    $region28: #{tpu_custom_call.1} parent=1 // pred_region
      _
    $region29: #{tpu_custom_call.1} parent=1 // pred_fallthru
      _
    // Predicated region
    $region30: #{tpu_custom_call.1} parent=1 // pred_check
      _
    $region31: #{tpu_custom_call.1} parent=1 // pred_check_branch
      %69 = sbr.rel (0) target = $region33
    $region32: #{tpu_custom_call.1} parent=1 // pred_region
      %70 = dma.done [#allocation3], 128
    $region33: #{tpu_custom_call.1} parent=1 // pred_fallthru
      _
    // Predicated region
    $region34: #{tpu_custom_call.1} parent=1 // pred_check
      _
    $region35: #{tpu_custom_call.1} parent=1 // pred_check_branch
      %72 = sbr.rel (0) target = $region37
    $region36: #{tpu_custom_call.1} parent=1 // pred_region
      %73 = dma.done [#allocation6], 768
    $region37: #{tpu_custom_call.1} parent=1 // pred_fallthru
      _
    // Predicated region
    $region38: #{tpu_custom_call.1} parent=1 // pred_check
      _
    $region39: #{tpu_custom_call.1} parent=1 // pred_check_branch
      %75 = sbr.rel (0) target = $region41
    $region40: #{tpu_custom_call.1} parent=1 // pred_region
      %76 = dma.done [#allocation6], 8192
    $region41: #{tpu_custom_call.1} parent=1 // pred_fallthru
      _
    // Predicated region
    $region42: #{tpu_custom_call.1} parent=1 // pred_check
      _
    $region43: #{tpu_custom_call.1} parent=1 // pred_check_branch
      %78 = sbr.rel (0) target = $region45
    $region44: #{tpu_custom_call.1} parent=1 // pred_region
      %79 = dma.done [#allocation9], 8192
    $region45: #{tpu_custom_call.1} parent=1 // pred_fallthru
      _
    %v80 = vld [vmem:[#allocation2] sm:$0xff]
    %v81 = vld [vmem:[#allocation5] sm:$0xff]
    %v82 = vld [vmem:[#allocation5 + $0x8] sm:$0xff]
    %v83 = vld [vmem:[#allocation5 + $0x10] sm:$0xff]
    %v84 = vld [vmem:[#allocation5 + $0x18] sm:$0xff]
    %v85 = vld [vmem:[#allocation5 + $0x20] sm:$0x1]
    %v86 = vld [vmem:[#allocation5 + $0x28] sm:$0x1]
    %v87 = vld [vmem:[%s2] sm:$0x3]
    %v89 = vlaneseq
    %v90 = vshrl.u32 %v89, 7
    %v91 = vsub.s32 0, %v90
    %v92 = vrot.slane %v87, %v91
    %v93 = vlaneseq
    %v94 = vshrl.u32 %v93, 7
    %v95 = vsub.s32 1, %v94
    %v96 = vrot.slane %v87, %v95
    %vm99 = vcmask 138240
    %v101 = vsel %vm99, %v80, 0
    %vm103 = vcmask 1040384
    %v105 = vsel %vm103, %v85, 0
    %v108 = vsel %vm103, %v86, 0
    %110 = vmatprep.subr.mxu0 0.0
    %111 = vmatpush1.msra.mxu0 0.0
    %112 = vmatprep.subr.mxu0 0.0
    %113 = vmatpush1.msra.mxu0 0.0
    %114 = vmatprep.subr.mxu0 0.0
    %115 = vmatpush1.msra.mxu0 0.0
    %116 = vmatprep.subr.mxu0 0.0
    %117 = vmatpush1.msra.mxu0 0.0
    %118 = vmatprep.subr.mxu0 0.0
    %119 = vmatpush1.msra.mxu0 0.0
    %120 = vmatprep.subr.mxu0 0.0
    %121 = vmatpush1.msra.mxu0 0.0
    %122 = vmatprep.subr.mxu0 0.0
    %123 = vmatpush1.msra.mxu0 0.0
    %124 = vmatprep.subr.mxu0 0.0
    %125 = vmatpush1.msra.mxu0 0.0
    %126 = vmatprep.subr.mxu0 0.0
    %127 = vmatpush1.msra.mxu0 0.0
    %128 = vmatprep.subr.mxu0 0.0
    %129 = vmatpush1.msra.mxu0 0.0
    %130 = vmatprep.subr.mxu0 0.0
    %131 = vmatpush1.msra.mxu0 0.0
    %132 = vmatprep.subr.mxu0 0.0
    %133 = vmatpush1.msra.mxu0 0.0
    %134 = vmatprep.subr.mxu0 0.0
    %135 = vmatpush1.msra.mxu0 0.0
    %136 = vmatprep.subr.mxu0 %v108
    %137 = vmatpush1.msra.mxu0 %v105
    %138 = vmatprep.subr.mxu0 %v84
    %139 = vmatpush1.msra.mxu0 %v83
    %140 = vmatprep.subr.mxu0 %v82
    %141 = vmatpush1.msra.mxu0 %v81
    %142 = vmatprep.subr.mxu0 0.0
    %143 = vmatpush2.msra.mxu0 0.0
    %144 = vmatprep.subr.mxu0 0.0
    %145 = vmatpush2.msra.mxu0 0.0
    %146 = vmatprep.subr.mxu0 0.0
    %147 = vmatpush2.msra.mxu0 0.0
    %148 = vmatprep.subr.mxu0 0.0
    %149 = vmatpush2.msra.mxu0 0.0
    %150 = vmatprep.subr.mxu0 0.0
    %151 = vmatpush2.msra.mxu0 0.0
    %152 = vmatprep.subr.mxu0 0.0
    %153 = vmatpush2.msra.mxu0 0.0
    %154 = vmatprep.subr.mxu0 0.0
    %155 = vmatpush2.msra.mxu0 0.0
    %156 = vmatprep.subr.mxu0 0.0
    %157 = vmatpush2.msra.mxu0 0.0
    %158 = vmatprep.subr.mxu0 0.0
    %159 = vmatpush2.msra.mxu0 0.0
    %160 = vmatprep.subr.mxu0 0.0
    %161 = vmatpush2.msra.mxu0 0.0
    %162 = vmatprep.subr.mxu0 0.0
    %163 = vmatpush2.msra.mxu0 0.0
    %164 = vmatprep.subr.mxu0 0.0
    %165 = vmatpush2.msra.mxu0 0.0
    %166 = vmatprep.subr.mxu0 0.0
    %167 = vmatpush2.msra.mxu0 0.0
    %168 = vmatprep.subr.mxu0 0.0
    %169 = vmatpush2.msra.mxu0 0.0
    %170 = vmatprep.subr.mxu0 0.0
    %171 = vmatpush2.msra.mxu0 0.0
    %172 = vmatprep.subr.mxu0 0.0
    %173 = vmatpush2.msra.mxu0 0.0
    %174 = vmatprep.mubr.f32.mxu0 0.0
    %175 = vmatmul.mubr.f32.gmra.mxu0 %v101
    %v176 = vpop.f32.mrf.mxu0
    %v177 = vadd.f32 %v92, %v176
    %v178 = vpop.f32.mrf.mxu0
    %v179 = vadd.f32 %v96, %v178
    %180 = vdwg.mxu0
    %v181 = vmax.f32 %v177, 0.0
    %v182 = vmax.f32 %v179, 0.0
    %v183 = vld [vmem:[#allocation7] sm:$0xff]
    %v184 = vld [vmem:[#allocation7 + $0x8] sm:$0xff]
    %v185 = vld [vmem:[#allocation7 + $0x10] sm:$0xff]
    %v186 = vld [vmem:[#allocation7 + $0x18] sm:$0xff]
    %v187 = vld [vmem:[#allocation7 + $0x20] sm:$0xff]
    %v188 = vld [vmem:[#allocation7 + $0x28] sm:$0xff]
    %v189 = vld [vmem:[#allocation7 + $0x30] sm:$0xff]
    %v190 = vld [vmem:[#allocation7 + $0x38] sm:$0xff]
    %v191 = vld [vmem:[#allocation7 + $0x40] sm:$0xff]
    %v192 = vld [vmem:[#allocation7 + $0x48] sm:$0xff]
    %v193 = vld [vmem:[#allocation7 + $0x50] sm:$0xff]
    %v194 = vld [vmem:[#allocation7 + $0x58] sm:$0xff]
    %v195 = vld [vmem:[#allocation7 + $0x60] sm:$0xff]
    %v196 = vld [vmem:[#allocation7 + $0x68] sm:$0xff]
    %v197 = vld [vmem:[#allocation7 + $0x70] sm:$0xff]
    %v198 = vld [vmem:[#allocation7 + $0x78] sm:$0xff]
    %v199 = vld [vmem:[#allocation7 + $0x80] sm:$0xff]
    %v200 = vld [vmem:[#allocation7 + $0x88] sm:$0xff]
    %v201 = vld [vmem:[#allocation7 + $0x90] sm:$0xff]
    %v202 = vld [vmem:[#allocation7 + $0x98] sm:$0xff]
    %v203 = vld [vmem:[#allocation7 + $0xa0] sm:$0xff]
    %v204 = vld [vmem:[#allocation7 + $0xa8] sm:$0xff]
    %v205 = vld [vmem:[#allocation7 + $0xb0] sm:$0xff]
    %v206 = vld [vmem:[#allocation7 + $0xb8] sm:$0xff]
    %v207 = vld [vmem:[#allocation7 + $0xc0] sm:$0xff]
    %v208 = vld [vmem:[#allocation7 + $0xc8] sm:$0xff]
    %v209 = vld [vmem:[#allocation7 + $0xd0] sm:$0xff]
    %v210 = vld [vmem:[#allocation7 + $0xd8] sm:$0xff]
    %v211 = vld [vmem:[#allocation7 + $0xe0] sm:$0xff]
    %v212 = vld [vmem:[#allocation7 + $0xe8] sm:$0xff]
    %v213 = vld [vmem:[#allocation7 + $0xf0] sm:$0xff]
    %v214 = vld [vmem:[#allocation7 + $0xf8] sm:$0xff]
    %v215 = vld [vmem:[#allocation7 + $0x100] sm:$0xff]
    %v216 = vld [vmem:[#allocation7 + $0x108] sm:$0xff]
    %v217 = vld [vmem:[#allocation7 + $0x110] sm:$0xff]
    %v218 = vld [vmem:[#allocation7 + $0x118] sm:$0xff]
    %v219 = vld [vmem:[#allocation7 + $0x120] sm:$0xff]
    %v220 = vld [vmem:[#allocation7 + $0x128] sm:$0xff]
    %v221 = vld [vmem:[#allocation7 + $0x130] sm:$0xff]
    %v222 = vld [vmem:[#allocation7 + $0x138] sm:$0xff]
    %v223 = vld [vmem:[#allocation7 + $0x140] sm:$0xff]
    %v224 = vld [vmem:[#allocation7 + $0x148] sm:$0xff]
    %v225 = vld [vmem:[#allocation7 + $0x150] sm:$0xff]
    %v226 = vld [vmem:[#allocation7 + $0x158] sm:$0xff]
    %v227 = vld [vmem:[#allocation7 + $0x160] sm:$0xff]
    %v228 = vld [vmem:[#allocation7 + $0x168] sm:$0xff]
    %v229 = vld [vmem:[#allocation7 + $0x170] sm:$0xff]
    %v230 = vld [vmem:[#allocation7 + $0x178] sm:$0xff]
    %v231 = vld [vmem:[#allocation7 + $0x180] sm:$0xff]
    %v232 = vld [vmem:[#allocation7 + $0x188] sm:$0xff]
    %v233 = vld [vmem:[#allocation7 + $0x190] sm:$0xff]
    %v234 = vld [vmem:[#allocation7 + $0x198] sm:$0xff]
    %v235 = vld [vmem:[#allocation7 + $0x1a0] sm:$0xff]
    %v236 = vld [vmem:[#allocation7 + $0x1a8] sm:$0xff]
    %v237 = vld [vmem:[#allocation7 + $0x1b0] sm:$0xff]
    %v238 = vld [vmem:[#allocation7 + $0x1b8] sm:$0xff]
    %v239 = vld [vmem:[#allocation7 + $0x1c0] sm:$0xff]
    %v240 = vld [vmem:[#allocation7 + $0x1c8] sm:$0xff]
    %v241 = vld [vmem:[#allocation7 + $0x1d0] sm:$0xff]
    %v242 = vld [vmem:[#allocation7 + $0x1d8] sm:$0xff]
    %v243 = vld [vmem:[#allocation7 + $0x1e0] sm:$0xff]
    %v244 = vld [vmem:[#allocation7 + $0x1e8] sm:$0xff]
    %v245 = vld [vmem:[#allocation7 + $0x1f0] sm:$0xff]
    %v246 = vld [vmem:[#allocation7 + $0x1f8] sm:$0xff]
    %v247 = vld [vmem:[%s4] sm:$0x3]
    %v249 = vlaneseq
    %v250 = vshrl.u32 %v249, 7
    %v251 = vsub.s32 0, %v250
    %v252 = vrot.slane %v247, %v251
    %v253 = vlaneseq
    %v254 = vshrl.u32 %v253, 7
    %v255 = vsub.s32 1, %v254
    %v256 = vrot.slane %v247, %v255
    %259 = vmatprep.subr.mxu0 %v214
    %260 = vmatpush1.msra.mxu0 %v213
    %261 = vmatprep.subr.mxu0 %v212
    %262 = vmatpush1.msra.mxu0 %v211
    %263 = vmatprep.subr.mxu0 %v210
    %264 = vmatpush1.msra.mxu0 %v209
    %265 = vmatprep.subr.mxu0 %v208
    %266 = vmatpush1.msra.mxu0 %v207
    %267 = vmatprep.subr.mxu0 %v206
    %268 = vmatpush1.msra.mxu0 %v205
    %269 = vmatprep.subr.mxu0 %v204
    %270 = vmatpush1.msra.mxu0 %v203
    %271 = vmatprep.subr.mxu0 %v202
    %272 = vmatpush1.msra.mxu0 %v201
    %273 = vmatprep.subr.mxu0 %v200
    %274 = vmatpush1.msra.mxu0 %v199
    %275 = vmatprep.subr.mxu0 %v198
    %276 = vmatpush1.msra.mxu0 %v197
    %277 = vmatprep.subr.mxu0 %v196
    %278 = vmatpush1.msra.mxu0 %v195
    %279 = vmatprep.subr.mxu0 %v194
    %280 = vmatpush1.msra.mxu0 %v193
    %281 = vmatprep.subr.mxu0 %v192
    %282 = vmatpush1.msra.mxu0 %v191
    %283 = vmatprep.subr.mxu0 %v190
    %284 = vmatpush1.msra.mxu0 %v189
    %285 = vmatprep.subr.mxu0 %v188
    %286 = vmatpush1.msra.mxu0 %v187
    %287 = vmatprep.subr.mxu0 %v186
    %288 = vmatpush1.msra.mxu0 %v185
    %289 = vmatprep.subr.mxu0 %v184
    %290 = vmatpush1.msra.mxu0 %v183
    %291 = vmatprep.subr.mxu0 %v246
    %292 = vmatpush2.msra.mxu0 %v245
    %293 = vmatprep.subr.mxu0 %v244
    %294 = vmatpush2.msra.mxu0 %v243
    %295 = vmatprep.subr.mxu0 %v242
    %296 = vmatpush2.msra.mxu0 %v241
    %297 = vmatprep.subr.mxu0 %v240
    %298 = vmatpush2.msra.mxu0 %v239
    %299 = vmatprep.subr.mxu0 %v238
    %300 = vmatpush2.msra.mxu0 %v237
    %301 = vmatprep.subr.mxu0 %v236
    %302 = vmatpush2.msra.mxu0 %v235
    %303 = vmatprep.subr.mxu0 %v234
    %304 = vmatpush2.msra.mxu0 %v233
    %305 = vmatprep.subr.mxu0 %v232
    %306 = vmatpush2.msra.mxu0 %v231
    %307 = vmatprep.subr.mxu0 %v230
    %308 = vmatpush2.msra.mxu0 %v229
    %309 = vmatprep.subr.mxu0 %v228
    %310 = vmatpush2.msra.mxu0 %v227
    %311 = vmatprep.subr.mxu0 %v226
    %312 = vmatpush2.msra.mxu0 %v225
    %313 = vmatprep.subr.mxu0 %v224
    %314 = vmatpush2.msra.mxu0 %v223
    %315 = vmatprep.subr.mxu0 %v222
    %316 = vmatpush2.msra.mxu0 %v221
    %317 = vmatprep.subr.mxu0 %v220
    %318 = vmatpush2.msra.mxu0 %v219
    %319 = vmatprep.subr.mxu0 %v218
    %320 = vmatpush2.msra.mxu0 %v217
    %321 = vmatprep.subr.mxu0 %v216
    %322 = vmatpush2.msra.mxu0 %v215
    %323 = vmatprep.mubr.f32.mxu0 %v182
    %324 = vmatmul.mubr.f32.gmra.mxu0 %v181
    %v325 = vpop.f32.mrf.mxu0
    %v326 = vadd.f32 %v252, %v325
    %v327 = vpop.f32.mrf.mxu0
    %v328 = vadd.f32 %v256, %v327
    %329 = vdwg.mxu0
    %v330 = vmax.f32 %v326, 0.0
    %v331 = vmax.f32 %v328, 0.0
    %v332 = vld [vmem:[#allocation8] sm:$0xff]
    %v333 = vld [vmem:[#allocation8 + $0x8] sm:$0xff]
    %v334 = vld [vmem:[#allocation8 + $0x10] sm:$0xff]
    %v335 = vld [vmem:[#allocation8 + $0x18] sm:$0xff]
    %v336 = vld [vmem:[#allocation8 + $0x20] sm:$0xff]
    %v337 = vld [vmem:[#allocation8 + $0x28] sm:$0xff]
    %v338 = vld [vmem:[#allocation8 + $0x30] sm:$0xff]
    %v339 = vld [vmem:[#allocation8 + $0x38] sm:$0xff]
    %v340 = vld [vmem:[#allocation8 + $0x40] sm:$0xff]
    %v341 = vld [vmem:[#allocation8 + $0x48] sm:$0xff]
    %v342 = vld [vmem:[#allocation8 + $0x50] sm:$0xff]
    %v343 = vld [vmem:[#allocation8 + $0x58] sm:$0xff]
    %v344 = vld [vmem:[#allocation8 + $0x60] sm:$0xff]
    %v345 = vld [vmem:[#allocation8 + $0x68] sm:$0xff]
    %v346 = vld [vmem:[#allocation8 + $0x70] sm:$0xff]
    %v347 = vld [vmem:[#allocation8 + $0x78] sm:$0xff]
    %v348 = vld [vmem:[#allocation8 + $0x80] sm:$0xff]
    %v349 = vld [vmem:[#allocation8 + $0x88] sm:$0xff]
    %v350 = vld [vmem:[#allocation8 + $0x90] sm:$0xff]
    %v351 = vld [vmem:[#allocation8 + $0x98] sm:$0xff]
    %v352 = vld [vmem:[#allocation8 + $0xa0] sm:$0xff]
    %v353 = vld [vmem:[#allocation8 + $0xa8] sm:$0xff]
    %v354 = vld [vmem:[#allocation8 + $0xb0] sm:$0xff]
    %v355 = vld [vmem:[#allocation8 + $0xb8] sm:$0xff]
    %v356 = vld [vmem:[#allocation8 + $0xc0] sm:$0xff]
    %v357 = vld [vmem:[#allocation8 + $0xc8] sm:$0xff]
    %v358 = vld [vmem:[#allocation8 + $0xd0] sm:$0xff]
    %v359 = vld [vmem:[#allocation8 + $0xd8] sm:$0xff]
    %v360 = vld [vmem:[#allocation8 + $0xe0] sm:$0xff]
    %v361 = vld [vmem:[#allocation8 + $0xe8] sm:$0xff]
    %v362 = vld [vmem:[#allocation8 + $0xf0] sm:$0xff]
    %v363 = vld [vmem:[#allocation8 + $0xf8] sm:$0xff]
    %v364 = vld [vmem:[#allocation8 + $0x100] sm:$0xff]
    %v365 = vld [vmem:[#allocation8 + $0x108] sm:$0xff]
    %v366 = vld [vmem:[#allocation8 + $0x110] sm:$0xff]
    %v367 = vld [vmem:[#allocation8 + $0x118] sm:$0xff]
    %v368 = vld [vmem:[#allocation8 + $0x120] sm:$0xff]
    %v369 = vld [vmem:[#allocation8 + $0x128] sm:$0xff]
    %v370 = vld [vmem:[#allocation8 + $0x130] sm:$0xff]
    %v371 = vld [vmem:[#allocation8 + $0x138] sm:$0xff]
    %v372 = vld [vmem:[#allocation8 + $0x140] sm:$0xff]
    %v373 = vld [vmem:[#allocation8 + $0x148] sm:$0xff]
    %v374 = vld [vmem:[#allocation8 + $0x150] sm:$0xff]
    %v375 = vld [vmem:[#allocation8 + $0x158] sm:$0xff]
    %v376 = vld [vmem:[#allocation8 + $0x160] sm:$0xff]
    %v377 = vld [vmem:[#allocation8 + $0x168] sm:$0xff]
    %v378 = vld [vmem:[#allocation8 + $0x170] sm:$0xff]
    %v379 = vld [vmem:[#allocation8 + $0x178] sm:$0xff]
    %v380 = vld [vmem:[#allocation8 + $0x180] sm:$0xff]
    %v381 = vld [vmem:[#allocation8 + $0x188] sm:$0xff]
    %v382 = vld [vmem:[#allocation8 + $0x190] sm:$0xff]
    %v383 = vld [vmem:[#allocation8 + $0x198] sm:$0xff]
    %v384 = vld [vmem:[#allocation8 + $0x1a0] sm:$0xff]
    %v385 = vld [vmem:[#allocation8 + $0x1a8] sm:$0xff]
    %v386 = vld [vmem:[#allocation8 + $0x1b0] sm:$0xff]
    %v387 = vld [vmem:[#allocation8 + $0x1b8] sm:$0xff]
    %v388 = vld [vmem:[#allocation8 + $0x1c0] sm:$0xff]
    %v389 = vld [vmem:[#allocation8 + $0x1c8] sm:$0xff]
    %v390 = vld [vmem:[#allocation8 + $0x1d0] sm:$0xff]
    %v391 = vld [vmem:[#allocation8 + $0x1d8] sm:$0xff]
    %v392 = vld [vmem:[#allocation8 + $0x1e0] sm:$0xff]
    %v393 = vld [vmem:[#allocation8 + $0x1e8] sm:$0xff]
    %v394 = vld [vmem:[#allocation8 + $0x1f0] sm:$0xff]
    %v395 = vld [vmem:[#allocation8 + $0x1f8] sm:$0xff]
    %v396 = vld [vmem:[%s6] sm:$0x3]
    %v398 = vlaneseq
    %v399 = vshrl.u32 %v398, 7
    %v400 = vsub.s32 0, %v399
    %v401 = vrot.slane %v396, %v400
    %v402 = vlaneseq
    %v403 = vshrl.u32 %v402, 7
    %v404 = vsub.s32 1, %v403
    %v405 = vrot.slane %v396, %v404
    %408 = vmatprep.subr.mxu0 %v363
    %409 = vmatpush1.msra.mxu0 %v362
    %410 = vmatprep.subr.mxu0 %v361
    %411 = vmatpush1.msra.mxu0 %v360
    %412 = vmatprep.subr.mxu0 %v359
    %413 = vmatpush1.msra.mxu0 %v358
    %414 = vmatprep.subr.mxu0 %v357
    %415 = vmatpush1.msra.mxu0 %v356
    %416 = vmatprep.subr.mxu0 %v355
    %417 = vmatpush1.msra.mxu0 %v354
    %418 = vmatprep.subr.mxu0 %v353
    %419 = vmatpush1.msra.mxu0 %v352
    %420 = vmatprep.subr.mxu0 %v351
    %421 = vmatpush1.msra.mxu0 %v350
    %422 = vmatprep.subr.mxu0 %v349
    %423 = vmatpush1.msra.mxu0 %v348
    %424 = vmatprep.subr.mxu0 %v347
    %425 = vmatpush1.msra.mxu0 %v346
    %426 = vmatprep.subr.mxu0 %v345
    %427 = vmatpush1.msra.mxu0 %v344
    %428 = vmatprep.subr.mxu0 %v343
    %429 = vmatpush1.msra.mxu0 %v342
    %430 = vmatprep.subr.mxu0 %v341
    %431 = vmatpush1.msra.mxu0 %v340
    %432 = vmatprep.subr.mxu0 %v339
    %433 = vmatpush1.msra.mxu0 %v338
    %434 = vmatprep.subr.mxu0 %v337
    %435 = vmatpush1.msra.mxu0 %v336
    %436 = vmatprep.subr.mxu0 %v335
    %437 = vmatpush1.msra.mxu0 %v334
    %438 = vmatprep.subr.mxu0 %v333
    %439 = vmatpush1.msra.mxu0 %v332
    %440 = vmatprep.subr.mxu0 %v395
    %441 = vmatpush2.msra.mxu0 %v394
    %442 = vmatprep.subr.mxu0 %v393
    %443 = vmatpush2.msra.mxu0 %v392
    %444 = vmatprep.subr.mxu0 %v391
    %445 = vmatpush2.msra.mxu0 %v390
    %446 = vmatprep.subr.mxu0 %v389
    %447 = vmatpush2.msra.mxu0 %v388
    %448 = vmatprep.subr.mxu0 %v387
    %449 = vmatpush2.msra.mxu0 %v386
    %450 = vmatprep.subr.mxu0 %v385
    %451 = vmatpush2.msra.mxu0 %v384
    %452 = vmatprep.subr.mxu0 %v383
    %453 = vmatpush2.msra.mxu0 %v382
    %454 = vmatprep.subr.mxu0 %v381
    %455 = vmatpush2.msra.mxu0 %v380
    %456 = vmatprep.subr.mxu0 %v379
    %457 = vmatpush2.msra.mxu0 %v378
    %458 = vmatprep.subr.mxu0 %v377
    %459 = vmatpush2.msra.mxu0 %v376
    %460 = vmatprep.subr.mxu0 %v375
    %461 = vmatpush2.msra.mxu0 %v374
    %462 = vmatprep.subr.mxu0 %v373
    %463 = vmatpush2.msra.mxu0 %v372
    %464 = vmatprep.subr.mxu0 %v371
    %465 = vmatpush2.msra.mxu0 %v370
    %466 = vmatprep.subr.mxu0 %v369
    %467 = vmatpush2.msra.mxu0 %v368
    %468 = vmatprep.subr.mxu0 %v367
    %469 = vmatpush2.msra.mxu0 %v366
    %470 = vmatprep.subr.mxu0 %v365
    %471 = vmatpush2.msra.mxu0 %v364
    %472 = vmatprep.mubr.f32.mxu0 %v331
    %473 = vmatmul.mubr.f32.gmra.mxu0 %v330
    %v474 = vpop.f32.mrf.mxu0
    %v475 = vadd.f32 %v401, %v474
    %v476 = vpop.f32.mrf.mxu0
    %v477 = vadd.f32 %v405, %v476
    %478 = vdwg.mxu0
    %v479 = vtanh.pop %v477
    %v480 = vadd.f32 %v479, 1.0
    %v481 = vmul.f32 %v480, 3.5
    %v482 = vadd.f32 %v481, -5.0
    %483 = vst [vmem:[#allocation10] sm:$0xff] %v475
    %484 = vst [vmem:[#allocation10 + $0x8] sm:$0xff] %v482
    // Predicated region
    $region46: #{tpu_custom_call.1} parent=1 // pred_check
      _
    $region47: #{tpu_custom_call.1} parent=1 // pred_check_branch
      %486 = sbr.rel (0) target = $region49
    $region48: #{tpu_custom_call.1} parent=1 // pred_region
      %s488 = ssub.s32 256, 256
      %489 = vsyncadd [#allocation4], %s488
      %s491 = sshll.u32 [#allocation10], 4
      %s492 = int_to_ptr.vmem [resolvable:$true] %s491
      %494 = dma.vmem_to_hbm [thread:$0]  %s492, 256, %s7, [#allocation4]
    $region49: #{tpu_custom_call.1} parent=1 // pred_fallthru
      _
    // Predicated region
    $region50: #{tpu_custom_call.1} parent=1 // pred_check
      _
    $region51: #{tpu_custom_call.1} parent=1 // pred_check_branch
      %496 = sbr.rel (0) target = $region53
    $region52: #{tpu_custom_call.1} parent=1 // pred_region
      %497 = dma.done [#allocation4], 256
    $region53: #{tpu_custom_call.1} parent=1 // pred_fallthru
      _
    %498 = vsyncpa [#allocation3], 1
    %499 = vsyncpa [#allocation6], 1
    %500 = vsyncpa [#allocation9], 1
    %501 = vsyncpa [#allocation4], 1

</llo_original>
